<compile_context>
chip_gen: v6e
topology: v6e:2x2x1
jax: 0.10.0
libtpu: 0.0.40
codegen_flags: <defaults>
</compile_context>

<pallas_src>
import math

import jax
import jax.numpy as jnp
import numpy as np
from jax.experimental import pallas as pl
from jax.experimental.pallas import tpu as pltpu


# --------------------------------- kernel -----------------------------------

def spatial_att_kernel(x_ref, ihp_ref, w_ref, b_ref, alpha_ref, out_ref):
    # x_ref:     (bb, C, HW) VMEM — bb batches, channels on sublanes, pixels on lanes
    # ihp_ref:   (HW, HW)    VMEM — constant (I - P)^T : fh = x @ ihp  (pool+up folded)
    # w_ref:     (C, C)      VMEM — 1x1-conv weight (out, in), already oriented
    # b_ref:     (C, 1)      VMEM — conv bias
    # alpha_ref: (1,)        SMEM — learnable scalar
    bb, C, HW = x_ref.shape
    x = x_ref[...].astype(jnp.float32)                                # (bb, C, HW)

    # Conv matmul first: (W @ x) has no dependency on the gate chain, so both
    # MXU matmuls can be issued back-to-back while the XLU (max/min) and EUP
    # (sigmoid) chain overlaps on their own slots.  (W @ x) * gate == W @ (x*gate)
    # because the gate broadcasts over channels.
    wx = jnp.einsum("oc,bcp->bop", w_ref[...], x,
                    preferred_element_type=jnp.float32)               # (bb, C, HW)

    # FH = x - up(avgpool7(x)) as a single MXU matmul against (I - P)^T,
    # with all bb*C rows merged into the M dimension.
    fh = jnp.dot(x.reshape(bb * C, HW), ihp_ref[...],
                 preferred_element_type=jnp.float32).reshape(bb, C, HW)

    mx = jnp.max(fh, axis=1, keepdims=True)                           # (bb, 1, HW)
    mn = jnp.min(fh, axis=1, keepdims=True)                           # (bb, 1, HW)

    a = alpha_ref[0]
    gate = a * jax.nn.sigmoid(mx) + (1.0 - a) * jax.nn.sigmoid(mn)    # (bb, 1, HW)

    out_ref[...] = (wx * gate + b_ref[...]).astype(out_ref.dtype)


# ------------------- constant (I - pool_up) matrix ---------------------------

def _fh_matrix(H, W):
    """(HW, HW) constant M with  fh_flat = x_flat @ M, where
    fh = x - nearest_up_x2(adaptive_avg_pool_7(x)).  Requires H == W == 14."""
    out = 7

    def axis_mat(n):
        pooled = np.zeros((out, n), np.float32)
        for i in range(out):
            s = (i * n) // out
            e = -(-((i + 1) * n) // out)           # ceil division
            pooled[i, s:e] = 1.0 / (e - s)
        up = np.zeros((2 * out, out), np.float32)
        for i in range(2 * out):
            up[i, i // 2] = 1.0
        return up @ pooled                         # (14, n)

    P = np.kron(axis_mat(H), axis_mat(W))          # (196, H*W): flat(FL) = P @ flat(x)
    M = np.eye(H * W, dtype=np.float32) - P        # flat(FH) = M @ flat(x)
    return jnp.asarray(M.T)                        # kernel computes fh = x_flat @ M.T


# --------------------------------- wrapper ----------------------------------

def spatial_att_forward(x, params, batch_block=None):
    """x: (B, C, H, W) float32 — NCHW, same as the PyTorch module."""
    B, C, H, W = x.shape
    # up(scale_factor=2) of the 7x7 pooled map must match x spatially for x - FL.
    assert H == 14 and W == 14, "spatial_att requires 14x14 spatial input"
    HW = H * W

    if batch_block is None:
        # One block per TensorCore: v7x has 2 TCs/chip, v5e/v6e have 1 — so the
        # grid collapses to a single step on single-TC chips (no serial per-step
        # overhead) and still feeds both cores on v7x.
        try:
            kind = jax.devices()[0].device_kind.lower()
        except Exception:
            kind = ""
        n_tc = 2 if "v7" in kind else 1
        steps = max(1, min(B, n_tc))
        while B % steps:
            steps -= 1
        batch_block = B // steps
    assert B % batch_block == 0
    steps = B // batch_block

    x_flat = x.reshape(B, C, HW)                   # pure reshape, no copy
    fh_m = _fh_matrix(H, W)                        # (HW, HW), folds pool+up+subtract
    conv_w = params["conv_w"].reshape(C, C)        # squeeze 1x1 kernel dims
    conv_b = params["conv_b"].reshape(C, 1)
    alpha = params["alpha"].reshape(1).astype(jnp.float32)

    def full(shp):
        return pl.BlockSpec(shp, lambda b, _r=len(shp): (0,) * _r)

    out = pl.pallas_call(
        spatial_att_kernel,
        out_shape=jax.ShapeDtypeStruct((B, C, HW), x.dtype),
        grid_spec=pltpu.PrefetchScalarGridSpec(
            num_scalar_prefetch=0,
            grid=(steps,),
            in_specs=[
                pl.BlockSpec((batch_block, C, HW), lambda b: (b, 0, 0)),  # x
                full((HW, HW)),                                           # (I - P)^T
                full((C, C)),                                             # conv weight
                full((C, 1)),                                             # conv bias
                pl.BlockSpec(memory_space=pltpu.MemorySpace.SMEM),        # alpha scalar
            ],
            out_specs=pl.BlockSpec((batch_block, C, HW), lambda b: (b, 0, 0)),
        ),
        compiler_params=pltpu.CompilerParams(dimension_semantics=("parallel",)),
    )(x_flat, fh_m, conv_w, conv_b, alpha)

    return out.reshape(B, C, H, W)
    # TODO(synk): if this layer is chained with neighbors, keep activations padded
    # to lane width 256 between kernels instead of 196 (inter-kernel layout choice).


# ------------------------------ pure-JAX reference ---------------------------

def reference_forward(x, params):
    B, C, H, W = x.shape
    xp = x.reshape(B, C, H // 2, 2, W // 2, 2).mean(axis=(3, 5))     # avg_pool to 7x7
    fl = jnp.repeat(jnp.repeat(xp, 2, axis=2), 2, axis=3)            # nearest up x2
    fh = x - fl
    mx = fh.max(axis=1, keepdims=True)
    mn = fh.min(axis=1, keepdims=True)
    alpha = params["alpha"][0]
    y = x * jax.nn.sigmoid(mx) * alpha + x * jax.nn.sigmoid(mn) * (1.0 - alpha)
    w = params["conv_w"].reshape(C, C)
    b = params["conv_b"]
    return jnp.einsum("oc,bchw->bohw", w, y) + b[None, :, None, None]


# ----------------------------------- main ------------------------------------

if __name__ == "__main__":
    B, C, H, W = 2, 16, 14, 14

    key = jax.random.PRNGKey(0)
    kx, kw, kb = jax.random.split(key, 3)
    x = jax.random.normal(kx, (B, C, H, W), jnp.float32)

    lim = 1.0 / math.sqrt(C)                       # PyTorch Conv2d default init range
    params = {
        "conv_w": jax.random.uniform(kw, (C, C, 1, 1), jnp.float32, -lim, lim),
        "conv_b": jax.random.uniform(kb, (C,), jnp.float32, -lim, lim),
        # module initializes alpha = 1; use 0.75 here so both gating branches
        # contribute and are actually verified.
        "alpha": jnp.full((1,), 0.75, jnp.float32),
    }

    out = jax.block_until_ready(spatial_att_forward(x, params))
    ref = jax.block_until_ready(reference_forward(x, params))
    np.testing.assert_allclose(np.asarray(out), np.asarray(ref), rtol=1e-4, atol=1e-4)

    print("KERNEL_OK")
</pallas_src>

<mosaic_0001>
module attributes {stable_mosaic.version = 11 : i64} {
  func.func @spatial_att_kernel(%arg0: i32, %arg1: memref<2x16x196xf32, #tpu.memory_space<vmem>>, %arg2: memref<196x196xf32, #tpu.memory_space<vmem>>, %arg3: memref<16x16xf32, #tpu.memory_space<vmem>>, %arg4: memref<16x1xf32, #tpu.memory_space<vmem>>, %arg5: memref<1xf32, #tpu.memory_space<smem>>, %arg6: memref<2x16x196xf32, #tpu.memory_space<vmem>>) attributes {dimension_semantics = [#tpu.dimension_semantics<parallel>], iteration_bounds = array<i64: 1>, scalar_prefetch = 0 : i64, scratch_operands = 0 : i64, tpu.core_type = #tpu.core_type<tc>, window_params = [{transform_indices = @transform_0, window_bounds = array<i64: 2, 16, 196>}, {pipeline_mode = #tpu.pipeline_mode<synchronous>, transform_indices = @transform_1, window_bounds = array<i64: 196, 196>}, {pipeline_mode = #tpu.pipeline_mode<synchronous>, transform_indices = @transform_2, window_bounds = array<i64: 16, 16>}, {pipeline_mode = #tpu.pipeline_mode<synchronous>, transform_indices = @transform_3, window_bounds = array<i64: 16, 1>}, {transform_indices = @transform_4, window_bounds = array<i64: 1>}, {transform_indices = @transform_5, window_bounds = array<i64: 2, 16, 196>}]} {
    %c0 = arith.constant 0 : index
    %c0_0 = arith.constant 0 : index
    %c0_1 = arith.constant 0 : index
    %0 = vector.load %arg1[%c0, %c0_0, %c0_1] : memref<2x16x196xf32, #tpu.memory_space<vmem>>, vector<2x16x196xf32>
    %c0_2 = arith.constant 0 : index
    %c0_3 = arith.constant 0 : index
    %1 = vector.load %arg3[%c0_2, %c0_3] : memref<16x16xf32, #tpu.memory_space<vmem>>, vector<16x16xf32>
    "tpu.trace_start"() <{level = 10 : i32, message = "oc,bcp->bop"}> : () -> ()
    %cst = arith.constant dense<0.000000e+00> : vector<2x196x16xf32>
    %2 = tpu.matmul %0, %1, %cst {dimension_numbers = #tpu.dot_dimension_numbers<[1], [1], [0, 2], [0], [0, 0, 0, 2, 1, 0], [], []>} : vector<2x16x196xf32>, vector<16x16xf32>, vector<2x196x16xf32> -> vector<2x196x16xf32>
    %3 = tpu.transpose %2, [0, 2, 1] : vector<2x196x16xf32> -> vector<2x16x196xf32>
    "tpu.trace_stop"() : () -> ()
    %4 = vector.shape_cast %0 : vector<2x16x196xf32> to vector<32x196xf32>
    %c0_4 = arith.constant 0 : index
    %c0_5 = arith.constant 0 : index
    %5 = vector.load %arg2[%c0_4, %c0_5] : memref<196x196xf32, #tpu.memory_space<vmem>>, vector<196x196xf32>
    %cst_6 = arith.constant dense<0.000000e+00> : vector<32x196xf32>
    %6 = tpu.matmul %4, %5, %cst_6 {dimension_numbers = #tpu.dot_dimension_numbers<[1], [0], [0], [1], [0, 0, 1, 1], [], []>} : vector<32x196xf32>, vector<196x196xf32>, vector<32x196xf32> -> vector<32x196xf32>
    %7 = vector.shape_cast %6 : vector<32x196xf32> to vector<2x16x196xf32>
    %cst_7 = arith.constant dense<0xFF800000> : vector<2x196xf32>
    %8 = vector.multi_reduction <maximumf>, %7, %cst_7 [1] : vector<2x16x196xf32> to vector<2x196xf32>
    %9 = vector.shape_cast %8 : vector<2x196xf32> to vector<2x1x196xf32>
    %cst_8 = arith.constant dense<0x7F800000> : vector<2x196xf32>
    %10 = vector.multi_reduction <minimumf>, %7, %cst_8 [1] : vector<2x16x196xf32> to vector<2x196xf32>
    %11 = vector.shape_cast %10 : vector<2x196xf32> to vector<2x1x196xf32>
    %c0_9 = arith.constant 0 : index
    %12 = memref.load %arg5[%c0_9] : memref<1xf32, #tpu.memory_space<smem>>
    %13 = arith.negf %9 : vector<2x1x196xf32>
    %14 = math.exp %13 : vector<2x1x196xf32>
    %cst_10 = arith.constant 1.000000e+00 : f32
    %15 = vector.broadcast %cst_10 : f32 to vector<2x1x196xf32>
    %16 = arith.addf %15, %14 : vector<2x1x196xf32>
    %17 = arith.divf %15, %16 : vector<2x1x196xf32>
    %18 = vector.broadcast %12 : f32 to vector<2x1x196xf32>
    %19 = arith.mulf %18, %17 : vector<2x1x196xf32>
    %cst_11 = arith.constant 1.000000e+00 : f32
    %20 = arith.subf %cst_11, %12 : f32
    %21 = arith.negf %11 : vector<2x1x196xf32>
    %22 = math.exp %21 : vector<2x1x196xf32>
    %cst_12 = arith.constant 1.000000e+00 : f32
    %23 = vector.broadcast %cst_12 : f32 to vector<2x1x196xf32>
    %24 = arith.addf %23, %22 : vector<2x1x196xf32>
    %25 = arith.divf %23, %24 : vector<2x1x196xf32>
    %26 = vector.broadcast %20 : f32 to vector<2x1x196xf32>
    %27 = arith.mulf %26, %25 : vector<2x1x196xf32>
    %28 = arith.addf %19, %27 : vector<2x1x196xf32>
    %29 = vector.broadcast %28 : vector<2x1x196xf32> to vector<2x16x196xf32>
    %30 = arith.mulf %3, %29 : vector<2x16x196xf32>
    %c0_13 = arith.constant 0 : index
    %c0_14 = arith.constant 0 : index
    %31 = vector.load %arg4[%c0_13, %c0_14] : memref<16x1xf32, #tpu.memory_space<vmem>>, vector<16x1xf32>
    %32 = vector.shape_cast %31 : vector<16x1xf32> to vector<1x16x1xf32>
    %33 = vector.broadcast %32 : vector<1x16x1xf32> to vector<2x16x196xf32>
    %34 = arith.addf %30, %33 : vector<2x16x196xf32>
    %c0_15 = arith.constant 0 : index
    %c0_16 = arith.constant 0 : index
    %c0_17 = arith.constant 0 : index
    %35 = vector.load %arg6[%c0_15, %c0_16, %c0_17] : memref<2x16x196xf32, #tpu.memory_space<vmem>>, vector<2x16x196xf32>
    tpu.vector_store %arg6[%c0_15, %c0_16, %c0_17], %34 {strides = array<i32>} : memref<2x16x196xf32, #tpu.memory_space<vmem>>, vector<2x16x196xf32>,
    return
  }
  func.func @transform_0(%arg0: i32) -> (i32, i32, i32) {
    %c0_i32 = arith.constant 0 : i32
    %c0_i32_0 = arith.constant 0 : i32
    %c0_i32_1 = arith.constant 0 : i32
    return %arg0, %c0_i32, %c0_i32_0 : i32, i32, i32
  }
  func.func @transform_1(%arg0: i32) -> (i32, i32) {
    %c0_i32 = arith.constant 0 : i32
    %c0_i32_0 = arith.constant 0 : i32
    %c0_i32_1 = arith.constant 0 : i32
    return %c0_i32, %c0_i32_0 : i32, i32
  }
  func.func @transform_2(%arg0: i32) -> (i32, i32) {
    %c0_i32 = arith.constant 0 : i32
    %c0_i32_0 = arith.constant 0 : i32
    %c0_i32_1 = arith.constant 0 : i32
    return %c0_i32, %c0_i32_0 : i32, i32
  }
  func.func @transform_3(%arg0: i32) -> (i32, i32) {
    %c0_i32 = arith.constant 0 : i32
    %c0_i32_0 = arith.constant 0 : i32
    %c0_i32_1 = arith.constant 0 : i32
    return %c0_i32, %c0_i32_0 : i32, i32
  }
  func.func @transform_4(%arg0: i32) -> i32 {
    %c0_i32 = arith.constant 0 : i32
    %c0_i32_0 = arith.constant 0 : i32
    return %c0_i32 : i32
  }
  func.func @transform_5(%arg0: i32) -> (i32, i32, i32) {
    %c0_i32 = arith.constant 0 : i32
    %c0_i32_0 = arith.constant 0 : i32
    %c0_i32_1 = arith.constant 0 : i32
    return %arg0, %c0_i32, %c0_i32_0 : i32, i32, i32
  }
}

</mosaic_0001>

<llo_original>
// kernel: tpu_custom_call.1
$region0: #{tpu_custom_call.1}
  #allocation0 [shape = 'u32[]', space=smem, size = 0x4, offset = 0x4, fixed_abs, tag = 'smem constant byte address 0x4 - core index']
  #allocation1 [shape = 'u32[144,128]{1,0:T(1,128)}', space=vmem, size = 0x12000, scoped, tag = 'internal scratch']
  #allocation2 [shape = 'f32[1]{0:T(128)S(6)}', space=smem, size = 0x200, scoped, tag = 'scoped memory for tpu_custom_call.1']
  %s0 = inlined_call_operand.hbm [shape: f32[2,16,196], index: 0, kind: input, shape index: {}]
  %s1 = inlined_call_operand.hbm [shape: f32[196,196], index: 1, kind: input, shape index: {}]
  %s2 = inlined_call_operand.vmem [shape: f32[16,16], index: 2, kind: input, shape index: {}]
  %s3 = inlined_call_operand.vmem [shape: f32[16,1], index: 3, kind: input, shape index: {}]
  %s4 = inlined_call_operand.<no memory space> [shape: f32[1], index: 4, kind: input, shape index: {}]
  %s5 = inlined_call_operand.hbm [shape: f32[2,16,196], index: 5, kind: output, shape index: {}]
  %s6 = sld [smem:[#allocation0]]
  $region38: #{tpu_custom_call.1} parent=0
    _
  %s8 = ssub.s32 1, %s6
  %s9 = scalar_select 0, %s8, %s6
  %10 = sst [smem:[#allocation2]] %s4
  $region1: #{tpu_custom_call.1} parent=0
    #allocation3 [shape = 'u8[32768]{0}', space=vmem, size = 0x8000, scoped, tag = 'input window, operand 0, single buffered']
    #allocation4 [shape = 's32[1]{0}', space=sflag, size = 0x4, scoped, tag = 'scoped memory for tpu_custom_call.1']
    #allocation5 [shape = 's32[1]{0}', space=sflag, size = 0x4, scoped, tag = 'scoped memory for tpu_custom_call.1']
    #allocation6 [shape = 'u8[204800]{0}', space=vmem, size = 0x32000, scoped, tag = 'input window, operand 1, single buffered']
    #allocation7 [shape = 's32[1]{0}', space=sflag, size = 0x4, scoped, tag = 'scoped memory for tpu_custom_call.1']
    #allocation8 [shape = 'u8[32768]{0}', space=vmem, size = 0x8000, scoped, tag = 'output window, operand 0, single buffered']
    %11 = vsyncpa [#allocation4], 0
    %12 = vsyncpa [#allocation7], 0
    %13 = vsyncpa [#allocation5], 0
    // Predicated region
    $region2: #{tpu_custom_call.1} parent=1 // pred_check
      _
    $region3: #{tpu_custom_call.1} parent=1 // pred_check_branch
      %15 = sbr.rel (0) target = $region5
    $region4: #{tpu_custom_call.1} parent=1 // pred_region
      %s17 = ssub.s32 1024, 1024
      %18 = vsyncadd [#allocation4], %s17
      %s19 = sshll.u32 [#allocation3], 4
      %s20 = int_to_ptr.vmem [resolvable:$true] %s19
      %25 = dma.hbm_to_vmem [thread:$0]  %s0, 1024, %s20, [#allocation4], 256, 256, 16
    $region5: #{tpu_custom_call.1} parent=1 // pred_fallthru
      _
    // Predicated region
    $region6: #{tpu_custom_call.1} parent=1 // pred_check
      _
    $region7: #{tpu_custom_call.1} parent=1 // pred_check_branch
      %27 = sbr.rel (0) target = $region9
    $region8: #{tpu_custom_call.1} parent=1 // pred_region
      %s29 = ssub.s32 6400, 6400
      %30 = vsyncadd [#allocation7], %s29
      %s31 = sshll.u32 [#allocation6], 4
      %s32 = int_to_ptr.vmem [resolvable:$true] %s31
      %37 = dma.hbm_to_vmem [thread:$0]  %s1, 6400, %s32, [#allocation7], 256, 256, 16
    $region9: #{tpu_custom_call.1} parent=1 // pred_fallthru
      _
    // Predicated region
    $region10: #{tpu_custom_call.1} parent=1 // pred_check
      _
    $region11: #{tpu_custom_call.1} parent=1 // pred_check_branch
      %39 = sbr.rel (0) target = $region13
    $region12: #{tpu_custom_call.1} parent=1 // pred_region
      _
    $region13: #{tpu_custom_call.1} parent=1 // pred_fallthru
      _
    // Predicated region
    $region14: #{tpu_custom_call.1} parent=1 // pred_check
      _
    $region15: #{tpu_custom_call.1} parent=1 // pred_check_branch
      %41 = sbr.rel (0) target = $region17
    $region16: #{tpu_custom_call.1} parent=1 // pred_region
      _
    $region17: #{tpu_custom_call.1} parent=1 // pred_fallthru
      _
    // Predicated region
    $region18: #{tpu_custom_call.1} parent=1 // pred_check
      _
    $region19: #{tpu_custom_call.1} parent=1 // pred_check_branch
      %43 = sbr.rel (0) target = $region21
    $region20: #{tpu_custom_call.1} parent=1 // pred_region
      _
    $region21: #{tpu_custom_call.1} parent=1 // pred_fallthru
      _
    // Predicated region
    $region22: #{tpu_custom_call.1} parent=1 // pred_check
      _
    $region23: #{tpu_custom_call.1} parent=1 // pred_check_branch
      %45 = sbr.rel (0) target = $region25
    $region24: #{tpu_custom_call.1} parent=1 // pred_region
      %46 = dma.done [#allocation4], 1024
    $region25: #{tpu_custom_call.1} parent=1 // pred_fallthru
      _
    // Predicated region
    $region26: #{tpu_custom_call.1} parent=1 // pred_check
      _
    $region27: #{tpu_custom_call.1} parent=1 // pred_check_branch
      %48 = sbr.rel (0) target = $region29
    $region28: #{tpu_custom_call.1} parent=1 // pred_region
      %49 = dma.done [#allocation7], 6400
    $region29: #{tpu_custom_call.1} parent=1 // pred_fallthru
      _
    %v50 = vld [vmem:[#allocation3] sm:$0xff]
    %v51 = vld [vmem:[#allocation3 + $0x8] sm:$0xff]
    %v52 = vld [vmem:[#allocation3 + $0x10] sm:$0xff]
    %v53 = vld [vmem:[#allocation3 + $0x18] sm:$0xff]
    %v54 = vld [vmem:[#allocation3 + $0x20] sm:$0xff]
    %v55 = vld [vmem:[#allocation3 + $0x28] sm:$0xff]
    %v56 = vld [vmem:[#allocation3 + $0x30] sm:$0xff]
    %v57 = vld [vmem:[#allocation3 + $0x38] sm:$0xff]
    %v58 = vld [vmem:[%s2] sm:$0xff]
    %v59 = vld [vmem:[%s2 + $0x8] sm:$0xff]
    %60 = vxpose.xlu0.b32.start [1/16] %v50, 128
    %61 = vxpose.xlu0.b32.cont [2/16] %v52, 128
    %62 = vxpose.xlu0.b32.cont [3/16] 0.0, 128
    %63 = vxpose.xlu0.b32.cont [4/16] 0.0, 128
    %64 = vxpose.xlu0.b32.cont [5/16] 0.0, 128
    %65 = vxpose.xlu0.b32.cont [6/16] 0.0, 128
    %66 = vxpose.xlu0.b32.cont [7/16] 0.0, 128
    %67 = vxpose.xlu0.b32.cont [8/16] 0.0, 128
    %68 = vxpose.xlu0.b32.cont [9/16] 0.0, 128
    %69 = vxpose.xlu0.b32.cont [10/16] 0.0, 128
    %70 = vxpose.xlu0.b32.cont [11/16] 0.0, 128
    %71 = vxpose.xlu0.b32.cont [12/16] 0.0, 128
    %72 = vxpose.xlu0.b32.cont [13/16] 0.0, 128
    %73 = vxpose.xlu0.b32.cont [14/16] 0.0, 128
    %74 = vxpose.xlu0.b32.cont [15/16] 0.0, 128
    %75 = vxpose.xlu0.b32.end [16/16] 0.0, 128
    %v76 = vpop.trf.xlu0
    %v77 = vpop.trf.xlu0
    %v78 = vpop.trf.xlu0
    %v79 = vpop.trf.xlu0
    %v80 = vpop.trf.xlu0
    %v81 = vpop.trf.xlu0
    %v82 = vpop.trf.xlu0
    %v83 = vpop.trf.xlu0
    %v84 = vpop.trf.xlu0
    %v85 = vpop.trf.xlu0
    %v86 = vpop.trf.xlu0
    %v87 = vpop.trf.xlu0
    %v88 = vpop.trf.xlu0
    %v89 = vpop.trf.xlu0
    %v90 = vpop.trf.xlu0
    %v91 = vpop.trf.xlu0
    %92 = vxpose.xlu0.b32.start [1/16] %v51, 128
    %93 = vxpose.xlu0.b32.cont [2/16] %v53, 128
    %94 = vxpose.xlu0.b32.cont [3/16] 0.0, 128
    %95 = vxpose.xlu0.b32.cont [4/16] 0.0, 128
    %96 = vxpose.xlu0.b32.cont [5/16] 0.0, 128
    %97 = vxpose.xlu0.b32.cont [6/16] 0.0, 128
    %98 = vxpose.xlu0.b32.cont [7/16] 0.0, 128
    %99 = vxpose.xlu0.b32.cont [8/16] 0.0, 128
    %100 = vxpose.xlu0.b32.cont [9/16] 0.0, 128
    %101 = vxpose.xlu0.b32.cont [10/16] 0.0, 128
    %102 = vxpose.xlu0.b32.cont [11/16] 0.0, 128
    %103 = vxpose.xlu0.b32.cont [12/16] 0.0, 128
    %104 = vxpose.xlu0.b32.cont [13/16] 0.0, 128
    %105 = vxpose.xlu0.b32.cont [14/16] 0.0, 128
    %106 = vxpose.xlu0.b32.cont [15/16] 0.0, 128
    %107 = vxpose.xlu0.b32.end [16/16] 0.0, 128
    %v108 = vpop.trf.xlu0
    %v109 = vpop.trf.xlu0
    %v110 = vpop.trf.xlu0
    %v111 = vpop.trf.xlu0
    %v112 = vpop.trf.xlu0
    %v113 = vpop.trf.xlu0
    %v114 = vpop.trf.xlu0
    %v115 = vpop.trf.xlu0
    %v116 = vpop.trf.xlu0
    %v117 = vpop.trf.xlu0
    %v118 = vpop.trf.xlu0
    %v119 = vpop.trf.xlu0
    %v120 = vpop.trf.xlu0
    %v121 = vpop.trf.xlu0
    %v122 = vpop.trf.xlu0
    %v123 = vpop.trf.xlu0
    %124 = vxpose.xlu0.b32.start [1/16] %v54, 128
    %125 = vxpose.xlu0.b32.cont [2/16] %v56, 128
    %126 = vxpose.xlu0.b32.cont [3/16] 0.0, 128
    %127 = vxpose.xlu0.b32.cont [4/16] 0.0, 128
    %128 = vxpose.xlu0.b32.cont [5/16] 0.0, 128
    %129 = vxpose.xlu0.b32.cont [6/16] 0.0, 128
    %130 = vxpose.xlu0.b32.cont [7/16] 0.0, 128
    %131 = vxpose.xlu0.b32.cont [8/16] 0.0, 128
    %132 = vxpose.xlu0.b32.cont [9/16] 0.0, 128
    %133 = vxpose.xlu0.b32.cont [10/16] 0.0, 128
    %134 = vxpose.xlu0.b32.cont [11/16] 0.0, 128
    %135 = vxpose.xlu0.b32.cont [12/16] 0.0, 128
    %136 = vxpose.xlu0.b32.cont [13/16] 0.0, 128
    %137 = vxpose.xlu0.b32.cont [14/16] 0.0, 128
    %138 = vxpose.xlu0.b32.cont [15/16] 0.0, 128
    %139 = vxpose.xlu0.b32.end [16/16] 0.0, 128
    %v140 = vpop.trf.xlu0
    %v141 = vpop.trf.xlu0
    %v142 = vpop.trf.xlu0
    %v143 = vpop.trf.xlu0
    %v144 = vpop.trf.xlu0
    %v145 = vpop.trf.xlu0
    %v146 = vpop.trf.xlu0
    %v147 = vpop.trf.xlu0
    %v148 = vpop.trf.xlu0
    %v149 = vpop.trf.xlu0
    %v150 = vpop.trf.xlu0
    %v151 = vpop.trf.xlu0
    %v152 = vpop.trf.xlu0
    %v153 = vpop.trf.xlu0
    %v154 = vpop.trf.xlu0
    %v155 = vpop.trf.xlu0
    %156 = vxpose.xlu0.b32.start [1/16] %v55, 128
    %157 = vxpose.xlu0.b32.cont [2/16] %v57, 128
    %158 = vxpose.xlu0.b32.cont [3/16] 0.0, 128
    %159 = vxpose.xlu0.b32.cont [4/16] 0.0, 128
    %160 = vxpose.xlu0.b32.cont [5/16] 0.0, 128
    %161 = vxpose.xlu0.b32.cont [6/16] 0.0, 128
    %162 = vxpose.xlu0.b32.cont [7/16] 0.0, 128
    %163 = vxpose.xlu0.b32.cont [8/16] 0.0, 128
    %164 = vxpose.xlu0.b32.cont [9/16] 0.0, 128
    %165 = vxpose.xlu0.b32.cont [10/16] 0.0, 128
    %166 = vxpose.xlu0.b32.cont [11/16] 0.0, 128
    %167 = vxpose.xlu0.b32.cont [12/16] 0.0, 128
    %168 = vxpose.xlu0.b32.cont [13/16] 0.0, 128
    %169 = vxpose.xlu0.b32.cont [14/16] 0.0, 128
    %170 = vxpose.xlu0.b32.cont [15/16] 0.0, 128
    %171 = vxpose.xlu0.b32.end [16/16] 0.0, 128
    %v172 = vpop.trf.xlu0
    %v173 = vpop.trf.xlu0
    %v174 = vpop.trf.xlu0
    %v175 = vpop.trf.xlu0
    %v176 = vpop.trf.xlu0
    %v177 = vpop.trf.xlu0
    %v178 = vpop.trf.xlu0
    %v179 = vpop.trf.xlu0
    %v180 = vpop.trf.xlu0
    %v181 = vpop.trf.xlu0
    %v182 = vpop.trf.xlu0
    %v183 = vpop.trf.xlu0
    %v184 = vpop.trf.xlu0
    %v185 = vpop.trf.xlu0
    %v186 = vpop.trf.xlu0
    %v187 = vpop.trf.xlu0
    %v238 = vcombine.high %v76, %v76
    %v239 = vcombine.high %v77, %v77
    %v240 = vcombine.high %v78, %v78
    %v241 = vcombine.high %v79, %v79
    %v242 = vcombine.high %v80, %v80
    %v243 = vcombine.high %v81, %v81
    %v244 = vcombine.high %v82, %v82
    %v245 = vcombine.high %v83, %v83
    %v246 = vcombine.high %v84, %v84
    %v247 = vcombine.high %v85, %v85
    %v248 = vcombine.high %v86, %v86
    %v249 = vcombine.high %v87, %v87
    %v250 = vcombine.high %v88, %v88
    %v251 = vcombine.high %v89, %v89
    %v252 = vcombine.high %v90, %v90
    %v253 = vcombine.high %v91, %v91
    %v254 = vcombine.high %v108, %v108
    %v255 = vcombine.high %v109, %v109
    %v256 = vcombine.high %v110, %v110
    %v257 = vcombine.high %v111, %v111
    %v258 = vcombine.high %v112, %v112
    %v259 = vcombine.high %v113, %v113
    %v260 = vcombine.high %v114, %v114
    %v261 = vcombine.high %v115, %v115
    %v262 = vcombine.high %v140, %v140
    %v263 = vcombine.high %v141, %v141
    %v264 = vcombine.high %v142, %v142
    %v265 = vcombine.high %v143, %v143
    %v266 = vcombine.high %v144, %v144
    %v267 = vcombine.high %v145, %v145
    %v268 = vcombine.high %v146, %v146
    %v269 = vcombine.high %v147, %v147
    %v270 = vcombine.high %v148, %v148
    %v271 = vcombine.high %v149, %v149
    %v272 = vcombine.high %v150, %v150
    %v273 = vcombine.high %v151, %v151
    %v274 = vcombine.high %v152, %v152
    %v275 = vcombine.high %v153, %v153
    %v276 = vcombine.high %v154, %v154
    %v277 = vcombine.high %v155, %v155
    %v278 = vcombine.high %v172, %v172
    %v279 = vcombine.high %v173, %v173
    %v280 = vcombine.high %v174, %v174
    %v281 = vcombine.high %v175, %v175
    %v282 = vcombine.high %v176, %v176
    %v283 = vcombine.high %v177, %v177
    %v284 = vcombine.high %v178, %v178
    %v285 = vcombine.high %v179, %v179
    %v286 = vcombine.low %v76, %v238
    %v287 = vcombine.low %v77, %v239
    %v288 = vcombine.low %v78, %v240
    %v289 = vcombine.low %v79, %v241
    %v290 = vcombine.low %v80, %v242
    %v291 = vcombine.low %v81, %v243
    %v292 = vcombine.low %v82, %v244
    %v293 = vcombine.low %v83, %v245
    %v294 = vcombine.low %v84, %v246
    %v295 = vcombine.low %v85, %v247
    %v296 = vcombine.low %v86, %v248
    %v297 = vcombine.low %v87, %v249
    %v298 = vcombine.low %v88, %v250
    %v299 = vcombine.low %v89, %v251
    %v300 = vcombine.low %v90, %v252
    %v301 = vcombine.low %v91, %v253
    %v302 = vcombine.low %v108, %v254
    %v303 = vcombine.low %v109, %v255
    %v304 = vcombine.low %v110, %v256
    %v305 = vcombine.low %v111, %v257
    %v306 = vcombine.low %v112, %v258
    %v307 = vcombine.low %v113, %v259
    %v308 = vcombine.low %v114, %v260
    %v309 = vcombine.low %v115, %v261
    %v310 = vcombine.low %v116, %v140
    %v311 = vcombine.low %v262, %v141
    %v312 = vcombine.low %v263, %v142
    %v313 = vcombine.low %v264, %v143
    %v314 = vcombine.low %v265, %v144
    %v315 = vcombine.low %v266, %v145
    %v316 = vcombine.low %v267, %v146
    %v317 = vcombine.low %v268, %v147
    %v318 = vcombine.low %v269, %v148
    %v319 = vcombine.low %v270, %v149
    %v320 = vcombine.low %v271, %v150
    %v321 = vcombine.low %v272, %v151
    %v322 = vcombine.low %v273, %v152
    %v323 = vcombine.low %v274, %v153
    %v324 = vcombine.low %v275, %v154
    %v325 = vcombine.low %v276, %v155
    %v326 = vcombine.low %v277, %v172
    %v327 = vcombine.low %v278, %v173
    %v328 = vcombine.low %v279, %v174
    %v329 = vcombine.low %v280, %v175
    %v330 = vcombine.low %v281, %v176
    %v331 = vcombine.low %v282, %v177
    %v332 = vcombine.low %v283, %v178
    %v333 = vcombine.low %v284, %v179
    %v334 = vcombine.low %v285, %v180
    %vm335 = vcmask 130048
    %v336 = vsel %vm335, %v286, 0
    %v338 = vsel %vm335, %v287, 0
    %v340 = vsel %vm335, %v288, 0
    %v342 = vsel %vm335, %v289, 0
    %v344 = vsel %vm335, %v290, 0
    %v346 = vsel %vm335, %v291, 0
    %v348 = vsel %vm335, %v292, 0
    %v350 = vsel %vm335, %v293, 0
    %v352 = vsel %vm335, %v294, 0
    %v354 = vsel %vm335, %v295, 0
    %v356 = vsel %vm335, %v296, 0
    %v358 = vsel %vm335, %v297, 0
    %v360 = vsel %vm335, %v298, 0
    %v362 = vsel %vm335, %v299, 0
    %v364 = vsel %vm335, %v300, 0
    %v366 = vsel %vm335, %v301, 0
    %v368 = vsel %vm335, %v302, 0
    %v370 = vsel %vm335, %v303, 0
    %v372 = vsel %vm335, %v304, 0
    %v374 = vsel %vm335, %v305, 0
    %v376 = vsel %vm335, %v306, 0
    %v378 = vsel %vm335, %v307, 0
    %v380 = vsel %vm335, %v308, 0
    %v382 = vsel %vm335, %v309, 0
    %v384 = vsel %vm335, %v310, 0
    %v386 = vsel %vm335, %v311, 0
    %v388 = vsel %vm335, %v312, 0
    %v390 = vsel %vm335, %v313, 0
    %v392 = vsel %vm335, %v314, 0
    %v394 = vsel %vm335, %v315, 0
    %v396 = vsel %vm335, %v316, 0
    %v398 = vsel %vm335, %v317, 0
    %v400 = vsel %vm335, %v318, 0
    %v402 = vsel %vm335, %v319, 0
    %v404 = vsel %vm335, %v320, 0
    %v406 = vsel %vm335, %v321, 0
    %v408 = vsel %vm335, %v322, 0
    %v410 = vsel %vm335, %v323, 0
    %v412 = vsel %vm335, %v324, 0
    %v414 = vsel %vm335, %v325, 0
    %v416 = vsel %vm335, %v326, 0
    %v418 = vsel %vm335, %v327, 0
    %v420 = vsel %vm335, %v328, 0
    %v422 = vsel %vm335, %v329, 0
    %v424 = vsel %vm335, %v330, 0
    %v426 = vsel %vm335, %v331, 0
    %v428 = vsel %vm335, %v332, 0
    %v430 = vsel %vm335, %v333, 0
    %v432 = vsel %vm335, %v334, 0
    %v435 = vsel %vm335, %v58, 0
    %v438 = vsel %vm335, %v59, 0
    %440 = vmatprep.subr.mxu0 0.0
    %441 = vmatpush1.xpose.msra.mxu0 0.0
    %442 = vmatprep.subr.mxu0 0.0
    %443 = vmatpush1.xpose.msra.mxu0 0.0
    %444 = vmatprep.subr.mxu0 0.0
    %445 = vmatpush1.xpose.msra.mxu0 0.0
    %446 = vmatprep.subr.mxu0 0.0
    %447 = vmatpush1.xpose.msra.mxu0 0.0
    %448 = vmatprep.subr.mxu0 0.0
    %449 = vmatpush1.xpose.msra.mxu0 0.0
    %450 = vmatprep.subr.mxu0 0.0
    %451 = vmatpush1.xpose.msra.mxu0 0.0
    %452 = vmatprep.subr.mxu0 0.0
    %453 = vmatpush1.xpose.msra.mxu0 0.0
    %454 = vmatprep.subr.mxu0 0.0
    %455 = vmatpush1.xpose.msra.mxu0 0.0
    %456 = vmatprep.subr.mxu0 0.0
    %457 = vmatpush1.xpose.msra.mxu0 0.0
    %458 = vmatprep.subr.mxu0 0.0
    %459 = vmatpush1.xpose.msra.mxu0 0.0
    %460 = vmatprep.subr.mxu0 0.0
    %461 = vmatpush1.xpose.msra.mxu0 0.0
    %462 = vmatprep.subr.mxu0 0.0
    %463 = vmatpush1.xpose.msra.mxu0 0.0
    %464 = vmatprep.subr.mxu0 0.0
    %465 = vmatpush1.xpose.msra.mxu0 0.0
    %466 = vmatprep.subr.mxu0 0.0
    %467 = vmatpush1.xpose.msra.mxu0 0.0
    %468 = vmatprep.subr.mxu0 0.0
    %469 = vmatpush1.xpose.msra.mxu0 %v438
    %470 = vmatprep.subr.mxu0 0.0
    %471 = vmatpush1.xpose.msra.mxu0 %v435
    %472 = vmatprep.subr.mxu0 0.0
    %473 = vmatpush2.xpose.msra.mxu0 0.0
    %474 = vmatprep.subr.mxu0 0.0
    %475 = vmatpush2.xpose.msra.mxu0 0.0
    %476 = vmatprep.subr.mxu0 0.0
    %477 = vmatpush2.xpose.msra.mxu0 0.0
    %478 = vmatprep.subr.mxu0 0.0
    %479 = vmatpush2.xpose.msra.mxu0 0.0
    %480 = vmatprep.subr.mxu0 0.0
    %481 = vmatpush2.xpose.msra.mxu0 0.0
    %482 = vmatprep.subr.mxu0 0.0
    %483 = vmatpush2.xpose.msra.mxu0 0.0
    %484 = vmatprep.subr.mxu0 0.0
    %485 = vmatpush2.xpose.msra.mxu0 0.0
    %486 = vmatprep.subr.mxu0 0.0
    %487 = vmatpush2.xpose.msra.mxu0 0.0
    %488 = vmatprep.subr.mxu0 0.0
    %489 = vmatpush2.xpose.msra.mxu0 0.0
    %490 = vmatprep.subr.mxu0 0.0
    %491 = vmatpush2.xpose.msra.mxu0 0.0
    %492 = vmatprep.subr.mxu0 0.0
    %493 = vmatpush2.xpose.msra.mxu0 0.0
    %494 = vmatprep.subr.mxu0 0.0
    %495 = vmatpush2.xpose.msra.mxu0 0.0
    %496 = vmatprep.subr.mxu0 0.0
    %497 = vmatpush2.xpose.msra.mxu0 0.0
    %498 = vmatprep.subr.mxu0 0.0
    %499 = vmatpush2.xpose.msra.mxu0 0.0
    %500 = vmatprep.subr.mxu0 0.0
    %501 = vmatpush2.xpose.msra.mxu0 0.0
    %502 = vmatprep.subr.mxu0 0.0
    %503 = vmatpush2.xpose.msra.mxu0 0.0
    %504 = vmatprep.mubr.f32.mxu0 0.0
    %505 = vmatmul.mubr.f32.gmra.mxu0 %v336
    %v506 = vpop.f32.mrf.mxu0
    %v507 = vadd.f32 0.0, %v506
    %v508 = vpop.f32.mrf.mxu0
    %509 = vmatprep.mubr.f32.mxu0 0.0
    %510 = vmatmul.mubr.f32.gmra.mxu0 %v338
    %v511 = vpop.f32.mrf.mxu0
    %v512 = vadd.f32 0.0, %v511
    %v513 = vpop.f32.mrf.mxu0
    %514 = vmatprep.mubr.f32.mxu0 0.0
    %515 = vmatmul.mubr.f32.gmra.mxu0 %v340
    %v516 = vpop.f32.mrf.mxu0
    %v517 = vadd.f32 0.0, %v516
    %v518 = vpop.f32.mrf.mxu0
    %519 = vmatprep.mubr.f32.mxu0 0.0
    %520 = vmatmul.mubr.f32.gmra.mxu0 %v342
    %v521 = vpop.f32.mrf.mxu0
    %v522 = vadd.f32 0.0, %v521
    %v523 = vpop.f32.mrf.mxu0
    %524 = vmatprep.mubr.f32.mxu0 0.0
    %525 = vmatmul.mubr.f32.gmra.mxu0 %v344
    %v526 = vpop.f32.mrf.mxu0
    %v527 = vadd.f32 0.0, %v526
    %v528 = vpop.f32.mrf.mxu0
    %529 = vmatprep.mubr.f32.mxu0 0.0
    %530 = vmatmul.mubr.f32.gmra.mxu0 %v346
    %v531 = vpop.f32.mrf.mxu0
    %v532 = vadd.f32 0.0, %v531
    %v533 = vpop.f32.mrf.mxu0
    %534 = vmatprep.mubr.f32.mxu0 0.0
    %535 = vmatmul.mubr.f32.gmra.mxu0 %v348
    %v536 = vpop.f32.mrf.mxu0
    %v537 = vadd.f32 0.0, %v536
    %v538 = vpop.f32.mrf.mxu0
    %539 = vmatprep.mubr.f32.mxu0 0.0
    %540 = vmatmul.mubr.f32.gmra.mxu0 %v350
    %v541 = vpop.f32.mrf.mxu0
    %v542 = vadd.f32 0.0, %v541
    %v543 = vpop.f32.mrf.mxu0
    %544 = vmatprep.mubr.f32.mxu0 0.0
    %545 = vmatmul.mubr.f32.gmra.mxu0 %v352
    %v546 = vpop.f32.mrf.mxu0
    %v547 = vadd.f32 0.0, %v546
    %v548 = vpop.f32.mrf.mxu0
    %549 = vmatprep.mubr.f32.mxu0 0.0
    %550 = vmatmul.mubr.f32.gmra.mxu0 %v354
    %v551 = vpop.f32.mrf.mxu0
    %v552 = vadd.f32 0.0, %v551
    %v553 = vpop.f32.mrf.mxu0
    %554 = vmatprep.mubr.f32.mxu0 0.0
    %555 = vmatmul.mubr.f32.gmra.mxu0 %v356
    %v556 = vpop.f32.mrf.mxu0
    %v557 = vadd.f32 0.0, %v556
    %v558 = vpop.f32.mrf.mxu0
    %559 = vmatprep.mubr.f32.mxu0 0.0
    %560 = vmatmul.mubr.f32.gmra.mxu0 %v358
    %v561 = vpop.f32.mrf.mxu0
    %v562 = vadd.f32 0.0, %v561
    %v563 = vpop.f32.mrf.mxu0
    %564 = vmatprep.mubr.f32.mxu0 0.0
    %565 = vmatmul.mubr.f32.gmra.mxu0 %v360
    %v566 = vpop.f32.mrf.mxu0
    %v567 = vadd.f32 0.0, %v566
    %v568 = vpop.f32.mrf.mxu0
    %569 = vmatprep.mubr.f32.mxu0 0.0
    %570 = vmatmul.mubr.f32.gmra.mxu0 %v362
    %v571 = vpop.f32.mrf.mxu0
    %v572 = vadd.f32 0.0, %v571
    %v573 = vpop.f32.mrf.mxu0
    %574 = vmatprep.mubr.f32.mxu0 0.0
    %575 = vmatmul.mubr.f32.gmra.mxu0 %v364
    %v576 = vpop.f32.mrf.mxu0
    %v577 = vadd.f32 0.0, %v576
    %v578 = vpop.f32.mrf.mxu0
    %579 = vmatprep.mubr.f32.mxu0 0.0
    %580 = vmatmul.mubr.f32.gmra.mxu0 %v366
    %v581 = vpop.f32.mrf.mxu0
    %v582 = vadd.f32 0.0, %v581
    %v583 = vpop.f32.mrf.mxu0
    %584 = vmatprep.mubr.f32.mxu0 0.0
    %585 = vmatmul.mubr.f32.gmra.mxu0 %v368
    %v586 = vpop.f32.mrf.mxu0
    %v587 = vadd.f32 0.0, %v586
    %v588 = vpop.f32.mrf.mxu0
    %589 = vmatprep.mubr.f32.mxu0 0.0
    %590 = vmatmul.mubr.f32.gmra.mxu0 %v370
    %v591 = vpop.f32.mrf.mxu0
    %v592 = vadd.f32 0.0, %v591
    %v593 = vpop.f32.mrf.mxu0
    %594 = vmatprep.mubr.f32.mxu0 0.0
    %595 = vmatmul.mubr.f32.gmra.mxu0 %v372
    %v596 = vpop.f32.mrf.mxu0
    %v597 = vadd.f32 0.0, %v596
    %v598 = vpop.f32.mrf.mxu0
    %599 = vmatprep.mubr.f32.mxu0 0.0
    %600 = vmatmul.mubr.f32.gmra.mxu0 %v374
    %v601 = vpop.f32.mrf.mxu0
    %v602 = vadd.f32 0.0, %v601
    %v603 = vpop.f32.mrf.mxu0
    %604 = vmatprep.mubr.f32.mxu0 0.0
    %605 = vmatmul.mubr.f32.gmra.mxu0 %v376
    %v606 = vpop.f32.mrf.mxu0
    %v607 = vadd.f32 0.0, %v606
    %v608 = vpop.f32.mrf.mxu0
    %609 = vmatprep.mubr.f32.mxu0 0.0
    %610 = vmatmul.mubr.f32.gmra.mxu0 %v378
    %v611 = vpop.f32.mrf.mxu0
    %v612 = vadd.f32 0.0, %v611
    %v613 = vpop.f32.mrf.mxu0
    %614 = vmatprep.mubr.f32.mxu0 0.0
    %615 = vmatmul.mubr.f32.gmra.mxu0 %v380
    %v616 = vpop.f32.mrf.mxu0
    %v617 = vadd.f32 0.0, %v616
    %v618 = vpop.f32.mrf.mxu0
    %619 = vmatprep.mubr.f32.mxu0 0.0
    %620 = vmatmul.mubr.f32.gmra.mxu0 %v382
    %v621 = vpop.f32.mrf.mxu0
    %v622 = vadd.f32 0.0, %v621
    %v623 = vpop.f32.mrf.mxu0
    %624 = vmatprep.mubr.f32.mxu0 0.0
    %625 = vmatmul.mubr.f32.gmra.mxu0 %v384
    %v626 = vpop.f32.mrf.mxu0
    %v627 = vadd.f32 0.0, %v626
    %v628 = vpop.f32.mrf.mxu0
    %629 = vmatprep.mubr.f32.mxu0 0.0
    %630 = vmatmul.mubr.f32.gmra.mxu0 %v386
    %v631 = vpop.f32.mrf.mxu0
    %v632 = vadd.f32 0.0, %v631
    %v633 = vpop.f32.mrf.mxu0
    %634 = vmatprep.mubr.f32.mxu0 0.0
    %635 = vmatmul.mubr.f32.gmra.mxu0 %v388
    %v636 = vpop.f32.mrf.mxu0
    %v637 = vadd.f32 0.0, %v636
    %v638 = vpop.f32.mrf.mxu0
    %639 = vmatprep.mubr.f32.mxu0 0.0
    %640 = vmatmul.mubr.f32.gmra.mxu0 %v390
    %v641 = vpop.f32.mrf.mxu0
    %v642 = vadd.f32 0.0, %v641
    %v643 = vpop.f32.mrf.mxu0
    %644 = vmatprep.mubr.f32.mxu0 0.0
    %645 = vmatmul.mubr.f32.gmra.mxu0 %v392
    %v646 = vpop.f32.mrf.mxu0
    %v647 = vadd.f32 0.0, %v646
    %v648 = vpop.f32.mrf.mxu0
    %649 = vmatprep.mubr.f32.mxu0 0.0
    %650 = vmatmul.mubr.f32.gmra.mxu0 %v394
    %v651 = vpop.f32.mrf.mxu0
    %v652 = vadd.f32 0.0, %v651
    %v653 = vpop.f32.mrf.mxu0
    %654 = vmatprep.mubr.f32.mxu0 0.0
    %655 = vmatmul.mubr.f32.gmra.mxu0 %v396
    %v656 = vpop.f32.mrf.mxu0
    %v657 = vadd.f32 0.0, %v656
    %v658 = vpop.f32.mrf.mxu0
    %659 = vmatprep.mubr.f32.mxu0 0.0
    %660 = vmatmul.mubr.f32.gmra.mxu0 %v398
    %v661 = vpop.f32.mrf.mxu0
    %v662 = vadd.f32 0.0, %v661
    %v663 = vpop.f32.mrf.mxu0
    %664 = vmatprep.mubr.f32.mxu0 0.0
    %665 = vmatmul.mubr.f32.gmra.mxu0 %v400
    %v666 = vpop.f32.mrf.mxu0
    %v667 = vadd.f32 0.0, %v666
    %v668 = vpop.f32.mrf.mxu0
    %669 = vmatprep.mubr.f32.mxu0 0.0
    %670 = vmatmul.mubr.f32.gmra.mxu0 %v402
    %v671 = vpop.f32.mrf.mxu0
    %v672 = vadd.f32 0.0, %v671
    %v673 = vpop.f32.mrf.mxu0
    %674 = vmatprep.mubr.f32.mxu0 0.0
    %675 = vmatmul.mubr.f32.gmra.mxu0 %v404
    %v676 = vpop.f32.mrf.mxu0
    %v677 = vadd.f32 0.0, %v676
    %v678 = vpop.f32.mrf.mxu0
    %679 = vmatprep.mubr.f32.mxu0 0.0
    %680 = vmatmul.mubr.f32.gmra.mxu0 %v406
    %v681 = vpop.f32.mrf.mxu0
    %v682 = vadd.f32 0.0, %v681
    %v683 = vpop.f32.mrf.mxu0
    %684 = vmatprep.mubr.f32.mxu0 0.0
    %685 = vmatmul.mubr.f32.gmra.mxu0 %v408
    %v686 = vpop.f32.mrf.mxu0
    %v687 = vadd.f32 0.0, %v686
    %v688 = vpop.f32.mrf.mxu0
    %689 = vmatprep.mubr.f32.mxu0 0.0
    %690 = vmatmul.mubr.f32.gmra.mxu0 %v410
    %v691 = vpop.f32.mrf.mxu0
    %v692 = vadd.f32 0.0, %v691
    %v693 = vpop.f32.mrf.mxu0
    %694 = vmatprep.mubr.f32.mxu0 0.0
    %695 = vmatmul.mubr.f32.gmra.mxu0 %v412
    %v696 = vpop.f32.mrf.mxu0
    %v697 = vadd.f32 0.0, %v696
    %v698 = vpop.f32.mrf.mxu0
    %699 = vmatprep.mubr.f32.mxu0 0.0
    %700 = vmatmul.mubr.f32.gmra.mxu0 %v414
    %v701 = vpop.f32.mrf.mxu0
    %v702 = vadd.f32 0.0, %v701
    %v703 = vpop.f32.mrf.mxu0
    %704 = vmatprep.mubr.f32.mxu0 0.0
    %705 = vmatmul.mubr.f32.gmra.mxu0 %v416
    %v706 = vpop.f32.mrf.mxu0
    %v707 = vadd.f32 0.0, %v706
    %v708 = vpop.f32.mrf.mxu0
    %709 = vmatprep.mubr.f32.mxu0 0.0
    %710 = vmatmul.mubr.f32.gmra.mxu0 %v418
    %v711 = vpop.f32.mrf.mxu0
    %v712 = vadd.f32 0.0, %v711
    %v713 = vpop.f32.mrf.mxu0
    %714 = vmatprep.mubr.f32.mxu0 0.0
    %715 = vmatmul.mubr.f32.gmra.mxu0 %v420
    %v716 = vpop.f32.mrf.mxu0
    %v717 = vadd.f32 0.0, %v716
    %v718 = vpop.f32.mrf.mxu0
    %719 = vmatprep.mubr.f32.mxu0 0.0
    %720 = vmatmul.mubr.f32.gmra.mxu0 %v422
    %v721 = vpop.f32.mrf.mxu0
    %v722 = vadd.f32 0.0, %v721
    %v723 = vpop.f32.mrf.mxu0
    %724 = vmatprep.mubr.f32.mxu0 0.0
    %725 = vmatmul.mubr.f32.gmra.mxu0 %v424
    %v726 = vpop.f32.mrf.mxu0
    %v727 = vadd.f32 0.0, %v726
    %v728 = vpop.f32.mrf.mxu0
    %729 = vmatprep.mubr.f32.mxu0 0.0
    %730 = vmatmul.mubr.f32.gmra.mxu0 %v426
    %v731 = vpop.f32.mrf.mxu0
    %v732 = vadd.f32 0.0, %v731
    %v733 = vpop.f32.mrf.mxu0
    %734 = vmatprep.mubr.f32.mxu0 0.0
    %735 = vmatmul.mubr.f32.gmra.mxu0 %v428
    %v736 = vpop.f32.mrf.mxu0
    %v737 = vadd.f32 0.0, %v736
    %v738 = vpop.f32.mrf.mxu0
    %739 = vmatprep.mubr.f32.mxu0 0.0
    %740 = vmatmul.mubr.f32.gmra.mxu0 %v430
    %v741 = vpop.f32.mrf.mxu0
    %v742 = vadd.f32 0.0, %v741
    %v743 = vpop.f32.mrf.mxu0
    %744 = vmatprep.mubr.f32.mxu0 0.0
    %745 = vmatmul.mubr.f32.gmra.mxu0 %v432
    %v746 = vpop.f32.mrf.mxu0
    %v747 = vadd.f32 0.0, %v746
    %v748 = vpop.f32.mrf.mxu0
    %749 = vdwg.mxu0
    %v799 = vcombine.high %v507, %v507
    %v800 = vcombine.high %v512, %v512
    %v801 = vcombine.high %v517, %v517
    %v802 = vcombine.high %v522, %v522
    %v803 = vcombine.high %v527, %v527
    %v804 = vcombine.high %v532, %v532
    %v805 = vcombine.high %v537, %v537
    %v806 = vcombine.high %v542, %v542
    %v807 = vcombine.high %v547, %v547
    %v808 = vcombine.high %v552, %v552
    %v809 = vcombine.high %v557, %v557
    %v810 = vcombine.high %v562, %v562
    %v811 = vcombine.high %v567, %v567
    %v812 = vcombine.high %v572, %v572
    %v813 = vcombine.high %v577, %v577
    %v814 = vcombine.high %v582, %v582
    %v815 = vcombine.high %v587, %v587
    %v816 = vcombine.high %v592, %v592
    %v817 = vcombine.high %v597, %v597
    %v818 = vcombine.high %v602, %v602
    %v819 = vcombine.high %v607, %v607
    %v820 = vcombine.high %v612, %v612
    %v821 = vcombine.high %v617, %v617
    %v822 = vcombine.high %v622, %v622
    %v823 = vcombine.high %v627, %v627
    %v824 = vcombine.high %v632, %v632
    %v825 = vcombine.high %v637, %v637
    %v826 = vcombine.high %v642, %v642
    %v827 = vcombine.high %v647, %v647
    %v828 = vcombine.high %v652, %v652
    %v829 = vcombine.high %v657, %v657
    %v830 = vcombine.high %v662, %v662
    %v831 = vcombine.high %v667, %v667
    %v832 = vcombine.high %v672, %v672
    %v833 = vcombine.high %v677, %v677
    %v834 = vcombine.high %v682, %v682
    %v835 = vcombine.high %v687, %v687
    %v836 = vcombine.high %v692, %v692
    %v837 = vcombine.high %v697, %v697
    %v838 = vcombine.high %v702, %v702
    %v839 = vcombine.high %v707, %v707
    %v840 = vcombine.high %v712, %v712
    %v841 = vcombine.high %v717, %v717
    %v842 = vcombine.high %v722, %v722
    %v843 = vcombine.high %v727, %v727
    %v844 = vcombine.high %v732, %v732
    %v845 = vcombine.high %v737, %v737
    %v846 = vcombine.high %v742, %v742
    %v847 = vcombine.high %v747, %v747
    %v849 = vcombine.low %v507, %v799
    %v850 = vcombine.low %v512, %v800
    %v851 = vcombine.low %v517, %v801
    %v852 = vcombine.low %v522, %v802
    %v853 = vcombine.low %v527, %v803
    %v854 = vcombine.low %v532, %v804
    %v855 = vcombine.low %v537, %v805
    %v856 = vcombine.low %v542, %v806
    %v857 = vcombine.low %v547, %v807
    %v858 = vcombine.low %v552, %v808
    %v859 = vcombine.low %v557, %v809
    %v860 = vcombine.low %v562, %v810
    %v861 = vcombine.low %v567, %v811
    %v862 = vcombine.low %v572, %v812
    %v863 = vcombine.low %v577, %v813
    %v864 = vcombine.low %v582, %v814
    %v865 = vcombine.low %v587, %v815
    %v866 = vcombine.low %v592, %v816
    %v867 = vcombine.low %v597, %v817
    %v868 = vcombine.low %v602, %v818
    %v869 = vcombine.low %v607, %v819
    %v870 = vcombine.low %v612, %v820
    %v871 = vcombine.low %v617, %v821
    %v872 = vcombine.low %v622, %v822
    %v873 = vcombine.low %v823, %v632
    %v874 = vcombine.low %v824, %v637
    %v875 = vcombine.low %v825, %v642
    %v876 = vcombine.low %v826, %v647
    %v877 = vcombine.low %v827, %v652
    %v878 = vcombine.low %v828, %v657
    %v879 = vcombine.low %v829, %v662
    %v880 = vcombine.low %v830, %v667
    %v881 = vcombine.low %v831, %v672
    %v882 = vcombine.low %v832, %v677
    %v883 = vcombine.low %v833, %v682
    %v884 = vcombine.low %v834, %v687
    %v885 = vcombine.low %v835, %v692
    %v886 = vcombine.low %v836, %v697
    %v887 = vcombine.low %v837, %v702
    %v888 = vcombine.low %v838, %v707
    %v889 = vcombine.low %v839, %v712
    %v890 = vcombine.low %v840, %v717
    %v891 = vcombine.low %v841, %v722
    %v892 = vcombine.low %v842, %v727
    %v893 = vcombine.low %v843, %v732
    %v894 = vcombine.low %v844, %v737
    %v895 = vcombine.low %v845, %v742
    %v896 = vcombine.low %v846, %v747
    %945 = vxpose.xlu0.b32.start [1/16] %v849, 128
    %946 = vxpose.xlu0.b32.cont [2/16] %v850, 128
    %947 = vxpose.xlu0.b32.cont [3/16] %v851, 128
    %948 = vxpose.xlu0.b32.cont [4/16] %v852, 128
    %949 = vxpose.xlu0.b32.cont [5/16] %v853, 128
    %950 = vxpose.xlu0.b32.cont [6/16] %v854, 128
    %951 = vxpose.xlu0.b32.cont [7/16] %v855, 128
    %952 = vxpose.xlu0.b32.cont [8/16] %v856, 128
    %953 = vxpose.xlu0.b32.cont [9/16] %v857, 128
    %954 = vxpose.xlu0.b32.cont [10/16] %v858, 128
    %955 = vxpose.xlu0.b32.cont [11/16] %v859, 128
    %956 = vxpose.xlu0.b32.cont [12/16] %v860, 128
    %957 = vxpose.xlu0.b32.cont [13/16] %v861, 128
    %958 = vxpose.xlu0.b32.cont [14/16] %v862, 128
    %959 = vxpose.xlu0.b32.cont [15/16] %v863, 128
    %960 = vxpose.xlu0.b32.end [16/16] %v864, 128
    %v961 = vpop.trf.xlu0
    %v962 = vpop.trf.xlu0
    %v963 = vpop.trf.xlu0
    %v964 = vpop.trf.xlu0
    %v965 = vpop.trf.xlu0
    %v966 = vpop.trf.xlu0
    %v967 = vpop.trf.xlu0
    %v968 = vpop.trf.xlu0
    %v969 = vpop.trf.xlu0
    %v970 = vpop.trf.xlu0
    %v971 = vpop.trf.xlu0
    %v972 = vpop.trf.xlu0
    %v973 = vpop.trf.xlu0
    %v974 = vpop.trf.xlu0
    %v975 = vpop.trf.xlu0
    %v976 = vpop.trf.xlu0
    %977 = vxpose.xlu0.b32.start [1/16] %v865, 128
    %978 = vxpose.xlu0.b32.cont [2/16] %v866, 128
    %979 = vxpose.xlu0.b32.cont [3/16] %v867, 128
    %980 = vxpose.xlu0.b32.cont [4/16] %v868, 128
    %981 = vxpose.xlu0.b32.cont [5/16] %v869, 128
    %982 = vxpose.xlu0.b32.cont [6/16] %v870, 128
    %983 = vxpose.xlu0.b32.cont [7/16] %v871, 128
    %984 = vxpose.xlu0.b32.cont [8/16] %v872, 128
    %985 = vxpose.xlu0.b32.cont [9/16] %v627, 128
    %986 = vxpose.xlu0.b32.cont [10/16] 0.0, 128
    %987 = vxpose.xlu0.b32.cont [11/16] 0.0, 128
    %988 = vxpose.xlu0.b32.cont [12/16] 0.0, 128
    %989 = vxpose.xlu0.b32.cont [13/16] 0.0, 128
    %990 = vxpose.xlu0.b32.cont [14/16] 0.0, 128
    %991 = vxpose.xlu0.b32.cont [15/16] 0.0, 128
    %992 = vxpose.xlu0.b32.end [16/16] 0.0, 128
    %v993 = vpop.trf.xlu0
    %v994 = vpop.trf.xlu0
    %v995 = vpop.trf.xlu0
    %v996 = vpop.trf.xlu0
    %v997 = vpop.trf.xlu0
    %v998 = vpop.trf.xlu0
    %v999 = vpop.trf.xlu0
    %v1000 = vpop.trf.xlu0
    %v1001 = vpop.trf.xlu0
    %v1002 = vpop.trf.xlu0
    %v1003 = vpop.trf.xlu0
    %v1004 = vpop.trf.xlu0
    %v1005 = vpop.trf.xlu0
    %v1006 = vpop.trf.xlu0
    %v1007 = vpop.trf.xlu0
    %v1008 = vpop.trf.xlu0
    %1009 = vxpose.xlu0.b32.start [1/16] %v873, 128
    %1010 = vxpose.xlu0.b32.cont [2/16] %v874, 128
    %1011 = vxpose.xlu0.b32.cont [3/16] %v875, 128
    %1012 = vxpose.xlu0.b32.cont [4/16] %v876, 128
    %1013 = vxpose.xlu0.b32.cont [5/16] %v877, 128
    %1014 = vxpose.xlu0.b32.cont [6/16] %v878, 128
    %1015 = vxpose.xlu0.b32.cont [7/16] %v879, 128
    %1016 = vxpose.xlu0.b32.cont [8/16] %v880, 128
    %1017 = vxpose.xlu0.b32.cont [9/16] %v881, 128
    %1018 = vxpose.xlu0.b32.cont [10/16] %v882, 128
    %1019 = vxpose.xlu0.b32.cont [11/16] %v883, 128
    %1020 = vxpose.xlu0.b32.cont [12/16] %v884, 128
    %1021 = vxpose.xlu0.b32.cont [13/16] %v885, 128
    %1022 = vxpose.xlu0.b32.cont [14/16] %v886, 128
    %1023 = vxpose.xlu0.b32.cont [15/16] %v887, 128
    %1024 = vxpose.xlu0.b32.end [16/16] %v888, 128
    %v1025 = vpop.trf.xlu0
    %v1026 = vpop.trf.xlu0
    %v1027 = vpop.trf.xlu0
    %v1028 = vpop.trf.xlu0
    %v1029 = vpop.trf.xlu0
    %v1030 = vpop.trf.xlu0
    %v1031 = vpop.trf.xlu0
    %v1032 = vpop.trf.xlu0
    %v1033 = vpop.trf.xlu0
    %v1034 = vpop.trf.xlu0
    %v1035 = vpop.trf.xlu0
    %v1036 = vpop.trf.xlu0
    %v1037 = vpop.trf.xlu0
    %v1038 = vpop.trf.xlu0
    %v1039 = vpop.trf.xlu0
    %v1040 = vpop.trf.xlu0
    %1041 = vxpose.xlu0.b32.start [1/16] %v889, 128
    %1042 = vxpose.xlu0.b32.cont [2/16] %v890, 128
    %1043 = vxpose.xlu0.b32.cont [3/16] %v891, 128
    %1044 = vxpose.xlu0.b32.cont [4/16] %v892, 128
    %1045 = vxpose.xlu0.b32.cont [5/16] %v893, 128
    %1046 = vxpose.xlu0.b32.cont [6/16] %v894, 128
    %1047 = vxpose.xlu0.b32.cont [7/16] %v895, 128
    %1048 = vxpose.xlu0.b32.cont [8/16] %v896, 128
    %1049 = vxpose.xlu0.b32.cont [9/16] %v847, 128
    %1050 = vxpose.xlu0.b32.cont [10/16] 0.0, 128
    %1051 = vxpose.xlu0.b32.cont [11/16] 0.0, 128
    %1052 = vxpose.xlu0.b32.cont [12/16] 0.0, 128
    %1053 = vxpose.xlu0.b32.cont [13/16] 0.0, 128
    %1054 = vxpose.xlu0.b32.cont [14/16] 0.0, 128
    %1055 = vxpose.xlu0.b32.cont [15/16] 0.0, 128
    %1056 = vxpose.xlu0.b32.end [16/16] 0.0, 128
    %v1057 = vpop.trf.xlu0
    %v1058 = vpop.trf.xlu0
    %v1059 = vpop.trf.xlu0
    %v1060 = vpop.trf.xlu0
    %v1061 = vpop.trf.xlu0
    %v1062 = vpop.trf.xlu0
    %v1063 = vpop.trf.xlu0
    %v1064 = vpop.trf.xlu0
    %v1065 = vpop.trf.xlu0
    %v1066 = vpop.trf.xlu0
    %v1067 = vpop.trf.xlu0
    %v1068 = vpop.trf.xlu0
    %v1069 = vpop.trf.xlu0
    %v1070 = vpop.trf.xlu0
    %v1071 = vpop.trf.xlu0
    %v1072 = vpop.trf.xlu0
    %v1073 = vld [vmem:[#allocation6] sm:$0xff]
    %v1074 = vld [vmem:[#allocation6 + $0x8] sm:$0xff]
    %v1075 = vld [vmem:[#allocation6 + $0x10] sm:$0xff]
    %v1076 = vld [vmem:[#allocation6 + $0x18] sm:$0xff]
    %v1077 = vld [vmem:[#allocation6 + $0x20] sm:$0xff]
    %v1078 = vld [vmem:[#allocation6 + $0x28] sm:$0xff]
    %v1079 = vld [vmem:[#allocation6 + $0x30] sm:$0xff]
    %v1080 = vld [vmem:[#allocation6 + $0x38] sm:$0xff]
    %v1081 = vld [vmem:[#allocation6 + $0x40] sm:$0xff]
    %v1082 = vld [vmem:[#allocation6 + $0x48] sm:$0xff]
    %v1083 = vld [vmem:[#allocation6 + $0x50] sm:$0xff]
    %v1084 = vld [vmem:[#allocation6 + $0x58] sm:$0xff]
    %v1085 = vld [vmem:[#allocation6 + $0x60] sm:$0xff]
    %v1086 = vld [vmem:[#allocation6 + $0x68] sm:$0xff]
    %v1087 = vld [vmem:[#allocation6 + $0x70] sm:$0xff]
    %v1088 = vld [vmem:[#allocation6 + $0x78] sm:$0xff]
    %v1089 = vld [vmem:[#allocation6 + $0x80] sm:$0xff]
    %v1090 = vld [vmem:[#allocation6 + $0x88] sm:$0xff]
    %v1091 = vld [vmem:[#allocation6 + $0x90] sm:$0xff]
    %v1092 = vld [vmem:[#allocation6 + $0x98] sm:$0xff]
    %v1093 = vld [vmem:[#allocation6 + $0xa0] sm:$0xff]
    %v1094 = vld [vmem:[#allocation6 + $0xa8] sm:$0xff]
    %v1095 = vld [vmem:[#allocation6 + $0xb0] sm:$0xff]
    %v1096 = vld [vmem:[#allocation6 + $0xb8] sm:$0xff]
    %v1097 = vld [vmem:[#allocation6 + $0xc0] sm:$0xff]
    %v1098 = vld [vmem:[#allocation6 + $0xc8] sm:$0xff]
    %v1099 = vld [vmem:[#allocation6 + $0xd0] sm:$0xff]
    %v1100 = vld [vmem:[#allocation6 + $0xd8] sm:$0xff]
    %v1101 = vld [vmem:[#allocation6 + $0xe0] sm:$0xff]
    %v1102 = vld [vmem:[#allocation6 + $0xe8] sm:$0xff]
    %v1103 = vld [vmem:[#allocation6 + $0xf0] sm:$0xff]
    %v1104 = vld [vmem:[#allocation6 + $0xf8] sm:$0xff]
    %v1105 = vld [vmem:[#allocation6 + $0x100] sm:$0xff]
    %v1106 = vld [vmem:[#allocation6 + $0x108] sm:$0xff]
    %v1107 = vld [vmem:[#allocation6 + $0x110] sm:$0xff]
    %v1108 = vld [vmem:[#allocation6 + $0x118] sm:$0xff]
    %v1109 = vld [vmem:[#allocation6 + $0x120] sm:$0xff]
    %v1110 = vld [vmem:[#allocation6 + $0x128] sm:$0xff]
    %v1111 = vld [vmem:[#allocation6 + $0x130] sm:$0xff]
    %v1112 = vld [vmem:[#allocation6 + $0x138] sm:$0xff]
    %v1113 = vld [vmem:[#allocation6 + $0x140] sm:$0xff]
    %v1114 = vld [vmem:[#allocation6 + $0x148] sm:$0xff]
    %v1115 = vld [vmem:[#allocation6 + $0x150] sm:$0xff]
    %v1116 = vld [vmem:[#allocation6 + $0x158] sm:$0xff]
    %v1117 = vld [vmem:[#allocation6 + $0x160] sm:$0xff]
    %v1118 = vld [vmem:[#allocation6 + $0x168] sm:$0xff]
    %v1119 = vld [vmem:[#allocation6 + $0x170] sm:$0xff]
    %v1120 = vld [vmem:[#allocation6 + $0x178] sm:$0xff]
    %v1121 = vld [vmem:[#allocation6 + $0x180] sm:$0xf]
    %v1122 = vld [vmem:[#allocation6 + $0x188] sm:$0xf]
    %vm1123 = vcmask 556032
    %v1125 = vsel %vm1123, %v51, 0
    %v1128 = vsel %vm1123, %v53, 0
    %v1131 = vsel %vm1123, %v55, 0
    %v1134 = vsel %vm1123, %v57, 0
    %vm1136 = vcmask 1043456
    %v1138 = vsel %vm1136, %v1121, 0
    %v1141 = vsel %vm1136, %v1122, 0
    %1143 = vmatprep.subr.mxu0 %v1104
    %1144 = vmatpush1.msra.mxu0 %v1103
    %1145 = vmatprep.subr.mxu0 %v1102
    %1146 = vmatpush1.msra.mxu0 %v1101
    %1147 = vmatprep.subr.mxu0 %v1100
    %1148 = vmatpush1.msra.mxu0 %v1099
    %1149 = vmatprep.subr.mxu0 %v1098
    %1150 = vmatpush1.msra.mxu0 %v1097
    %1151 = vmatprep.subr.mxu0 %v1096
    %1152 = vmatpush1.msra.mxu0 %v1095
    %1153 = vmatprep.subr.mxu0 %v1094
    %1154 = vmatpush1.msra.mxu0 %v1093
    %1155 = vmatprep.subr.mxu0 %v1092
    %1156 = vmatpush1.msra.mxu0 %v1091
    %1157 = vmatprep.subr.mxu0 %v1090
    %1158 = vmatpush1.msra.mxu0 %v1089
    %1159 = vmatprep.subr.mxu0 %v1088
    %1160 = vmatpush1.msra.mxu0 %v1087
    %1161 = vmatprep.subr.mxu0 %v1086
    %1162 = vmatpush1.msra.mxu0 %v1085
    %1163 = vmatprep.subr.mxu0 %v1084
    %1164 = vmatpush1.msra.mxu0 %v1083
    %1165 = vmatprep.subr.mxu0 %v1082
    %1166 = vmatpush1.msra.mxu0 %v1081
    %1167 = vmatprep.subr.mxu0 %v1080
    %1168 = vmatpush1.msra.mxu0 %v1079
    %1169 = vmatprep.subr.mxu0 %v1078
    %1170 = vmatpush1.msra.mxu0 %v1077
    %1171 = vmatprep.subr.mxu0 %v1076
    %1172 = vmatpush1.msra.mxu0 %v1075
    %1173 = vmatprep.subr.mxu0 %v1074
    %1174 = vmatpush1.msra.mxu0 %v1073
    %1175 = vmatprep.subr.mxu0 0.0
    %1176 = vmatpush2.msra.mxu0 0.0
    %1177 = vmatprep.subr.mxu0 0.0
    %1178 = vmatpush2.msra.mxu0 0.0
    %1179 = vmatprep.subr.mxu0 0.0
    %1180 = vmatpush2.msra.mxu0 0.0
    %1181 = vmatprep.subr.mxu0 0.0
    %1182 = vmatpush2.msra.mxu0 0.0
    %1183 = vmatprep.subr.mxu0 0.0
    %1184 = vmatpush2.msra.mxu0 0.0
    %1185 = vmatprep.subr.mxu0 0.0
    %1186 = vmatpush2.msra.mxu0 0.0
    %1187 = vmatprep.subr.mxu0 0.0
    %1188 = vmatpush2.msra.mxu0 0.0
    %1189 = vmatprep.subr.mxu0 %v1141
    %1190 = vmatpush2.msra.mxu0 %v1138
    %1191 = vmatprep.subr.mxu0 %v1120
    %1192 = vmatpush2.msra.mxu0 %v1119
    %1193 = vmatprep.subr.mxu0 %v1118
    %1194 = vmatpush2.msra.mxu0 %v1117
    %1195 = vmatprep.subr.mxu0 %v1116
    %1196 = vmatpush2.msra.mxu0 %v1115
    %1197 = vmatprep.subr.mxu0 %v1114
    %1198 = vmatpush2.msra.mxu0 %v1113
    %1199 = vmatprep.subr.mxu0 %v1112
    %1200 = vmatpush2.msra.mxu0 %v1111
    %1201 = vmatprep.subr.mxu0 %v1110
    %1202 = vmatpush2.msra.mxu0 %v1109
    %1203 = vmatprep.subr.mxu0 %v1108
    %1204 = vmatpush2.msra.mxu0 %v1107
    %1205 = vmatprep.subr.mxu0 %v1106
    %1206 = vmatpush2.msra.mxu0 %v1105
    %1207 = vmatprep.mubr.f32.mxu0 %v1125
    %1208 = vmatmul.mubr.f32.gmra.mxu0 %v50
    %v1209 = vpop.f32.mrf.mxu0
    %v1210 = vadd.f32 0.0, %v1209
    %v1211 = vpop.f32.mrf.mxu0
    %v1212 = vadd.f32 0.0, %v1211
    %1213 = vmatprep.mubr.f32.mxu0 %v1128
    %1214 = vmatmul.mubr.f32.gmra.mxu0 %v52
    %v1215 = vpop.f32.mrf.mxu0
    %v1216 = vadd.f32 0.0, %v1215
    %v1217 = vpop.f32.mrf.mxu0
    %v1218 = vadd.f32 0.0, %v1217
    %1219 = vmatprep.mubr.f32.mxu0 %v1131
    %1220 = vmatmul.mubr.f32.gmra.mxu0 %v54
    %v1221 = vpop.f32.mrf.mxu0
    %v1222 = vadd.f32 0.0, %v1221
    %v1223 = vpop.f32.mrf.mxu0
    %v1224 = vadd.f32 0.0, %v1223
    %1225 = vmatprep.mubr.f32.mxu0 %v1134
    %1226 = vmatmul.mubr.f32.gmra.mxu0 %v56
    %v1227 = vpop.f32.mrf.mxu0
    %v1228 = vadd.f32 0.0, %v1227
    %v1229 = vpop.f32.mrf.mxu0
    %v1230 = vadd.f32 0.0, %v1229
    %1231 = vdwg.mxu0
    %v1232 = vmax.f32 %v1210, %v1216
    %v1233 = vrot.slane %v1232, 4
    %v1234 = vmax.f32 %v1232, %v1233
    %v1235 = vrot.slane %v1234, 2
    %v1236 = vmax.f32 %v1234, %v1235
    %v1237 = vrot.slane %v1236, 1
    %v1238 = vmax.f32 %v1236, %v1237
    %v1239 = vsel %vm1123, %v1212, -inf
    %v1240 = vsel %vm1123, %v1218, -inf
    %v1241 = vmax.f32 %v1239, %v1240
    %v1242 = vrot.slane %v1241, 4
    %v1243 = vmax.f32 %v1241, %v1242
    %v1244 = vrot.slane %v1243, 2
    %v1245 = vmax.f32 %v1243, %v1244
    %v1246 = vrot.slane %v1245, 1
    %v1247 = vmax.f32 %v1245, %v1246
    %v1248 = vmax.f32 %v1222, %v1228
    %v1249 = vrot.slane %v1248, 4
    %v1250 = vmax.f32 %v1248, %v1249
    %v1251 = vrot.slane %v1250, 2
    %v1252 = vmax.f32 %v1250, %v1251
    %v1253 = vrot.slane %v1252, 1
    %v1254 = vmax.f32 %v1252, %v1253
    %v1255 = vsel %vm1123, %v1224, -inf
    %v1256 = vsel %vm1123, %v1230, -inf
    %v1257 = vmax.f32 %v1255, %v1256
    %v1258 = vrot.slane %v1257, 4
    %v1259 = vmax.f32 %v1257, %v1258
    %v1260 = vrot.slane %v1259, 2
    %v1261 = vmax.f32 %v1259, %v1260
    %v1262 = vrot.slane %v1261, 1
    %v1263 = vmax.f32 %v1261, %v1262
    %v1264 = vmin.f32 %v1210, %v1216
    %v1265 = vrot.slane %v1264, 4
    %v1266 = vmin.f32 %v1264, %v1265
    %v1267 = vrot.slane %v1266, 2
    %v1268 = vmin.f32 %v1266, %v1267
    %v1269 = vrot.slane %v1268, 1
    %v1270 = vmin.f32 %v1268, %v1269
    %v1271 = vsel %vm1123, %v1212, inf
    %v1272 = vsel %vm1123, %v1218, inf
    %v1273 = vmin.f32 %v1271, %v1272
    %v1274 = vrot.slane %v1273, 4
    %v1275 = vmin.f32 %v1273, %v1274
    %v1276 = vrot.slane %v1275, 2
    %v1277 = vmin.f32 %v1275, %v1276
    %v1278 = vrot.slane %v1277, 1
    %v1279 = vmin.f32 %v1277, %v1278
    %v1280 = vmin.f32 %v1222, %v1228
    %v1281 = vrot.slane %v1280, 4
    %v1282 = vmin.f32 %v1280, %v1281
    %v1283 = vrot.slane %v1282, 2
    %v1284 = vmin.f32 %v1282, %v1283
    %v1285 = vrot.slane %v1284, 1
    %v1286 = vmin.f32 %v1284, %v1285
    %v1287 = vsel %vm1123, %v1224, inf
    %v1288 = vsel %vm1123, %v1230, inf
    %v1289 = vmin.f32 %v1287, %v1288
    %v1290 = vrot.slane %v1289, 4
    %v1291 = vmin.f32 %v1289, %v1290
    %v1292 = vrot.slane %v1291, 2
    %v1293 = vmin.f32 %v1291, %v1292
    %v1294 = vrot.slane %v1293, 1
    %v1295 = vmin.f32 %v1293, %v1294
    %s1296 = sld [smem:[#allocation2]]
    %v1297 = vxor.u32 %v1238, 2147483648
    %v1298 = vxor.u32 %v1247, 2147483648
    %v1299 = vxor.u32 %v1254, 2147483648
    %v1300 = vxor.u32 %v1263, 2147483648
    %v1301 = vmul.f32 %v1297, 1.442695
    %v1302 = vpow.pop %v1301
    %v1303 = vmul.f32 %v1298, 1.442695
    %v1304 = vpow.pop %v1303
    %v1305 = vmul.f32 %v1299, 1.442695
    %v1306 = vpow.pop %v1305
    %v1307 = vmul.f32 %v1300, 1.442695
    %v1308 = vpow.pop %v1307
    %v1309 = vadd.f32 %v1302, 1.0
    %v1310 = vadd.f32 %v1304, 1.0
    %v1311 = vadd.f32 %v1306, 1.0
    %v1312 = vadd.f32 %v1308, 1.0
    %v1313 = vrcp.pop %v1309
    %v1314 = vmul.f32 1.0, %v1313
    %v1315 = vrcp.pop %v1310
    %v1316 = vmul.f32 1.0, %v1315
    %v1317 = vrcp.pop %v1311
    %v1318 = vmul.f32 1.0, %v1317
    %v1319 = vrcp.pop %v1312
    %v1320 = vmul.f32 1.0, %v1319
    %v1321 = vstv %s1296
    %v1322 = vmul.f32 %v1321, %v1314
    %v1323 = vmul.f32 %v1321, %v1316
    %v1324 = vmul.f32 %v1321, %v1318
    %v1325 = vmul.f32 %v1321, %v1320
    %s1326 = ssub.f32 1.0, %s1296
    %v1327 = vxor.u32 %v1270, 2147483648
    %v1328 = vxor.u32 %v1279, 2147483648
    %v1329 = vxor.u32 %v1286, 2147483648
    %v1330 = vxor.u32 %v1295, 2147483648
    %v1331 = vmul.f32 %v1327, 1.442695
    %v1332 = vpow.pop %v1331
    %v1333 = vmul.f32 %v1328, 1.442695
    %v1334 = vpow.pop %v1333
    %v1335 = vmul.f32 %v1329, 1.442695
    %v1336 = vpow.pop %v1335
    %v1337 = vmul.f32 %v1330, 1.442695
    %v1338 = vpow.pop %v1337
    %v1339 = vadd.f32 %v1332, 1.0
    %v1340 = vadd.f32 %v1334, 1.0
    %v1341 = vadd.f32 %v1336, 1.0
    %v1342 = vadd.f32 %v1338, 1.0
    %v1343 = vrcp.pop %v1339
    %v1344 = vmul.f32 1.0, %v1343
    %v1345 = vrcp.pop %v1340
    %v1346 = vmul.f32 1.0, %v1345
    %v1347 = vrcp.pop %v1341
    %v1348 = vmul.f32 1.0, %v1347
    %v1349 = vrcp.pop %v1342
    %v1350 = vmul.f32 1.0, %v1349
    %v1351 = vstv %s1326
    %v1352 = vmul.f32 %v1351, %v1344
    %v1353 = vmul.f32 %v1351, %v1346
    %v1354 = vmul.f32 %v1351, %v1348
    %v1355 = vmul.f32 %v1351, %v1350
    %v1356 = vadd.f32 %v1322, %v1352
    %v1357 = vadd.f32 %v1323, %v1353
    %v1358 = vadd.f32 %v1324, %v1354
    %v1359 = vadd.f32 %v1325, %v1355
    %v1360 = vmul.f32 %v961, %v1356
    %v1361 = vmul.f32 %v993, %v1357
    %v1362 = vmul.f32 %v962, %v1356
    %v1363 = vmul.f32 %v994, %v1357
    %v1364 = vmul.f32 %v1025, %v1358
    %v1365 = vmul.f32 %v1057, %v1359
    %v1366 = vmul.f32 %v1026, %v1358
    %v1367 = vmul.f32 %v1058, %v1359
    %v1368 = vld [vmem:[%s3] sm:$0xff]
    %v1369 = vld [vmem:[%s3 + $0x8] sm:$0xff]
    %1371 = vset.pattern.permute.xlu0 0
    %1372 = vperm.xlu0 %1371, %v1368
    %v1373 = vpop.permute.xlu0 %1372
    %1376 = vset.pattern.permute.xlu0 0
    %1377 = vperm.xlu0 %1376, %v1369
    %v1378 = vpop.permute.xlu0 %1377
    %v1380 = vadd.f32 %v1360, %v1373
    %v1381 = vadd.f32 %v1361, %v1373
    %v1382 = vadd.f32 %v1362, %v1378
    %v1383 = vadd.f32 %v1363, %v1378
    %v1384 = vadd.f32 %v1364, %v1373
    %v1385 = vadd.f32 %v1365, %v1373
    %v1386 = vadd.f32 %v1366, %v1378
    %v1387 = vadd.f32 %v1367, %v1378
    %1388 = vst [vmem:[#allocation8] sm:$0xff] %v1380
    %1389 = vst.msk [vmem:[#allocation8 + $0x8] sm:$0xff] %vm1123, %v1381
    %1390 = vst [vmem:[#allocation8 + $0x10] sm:$0xff] %v1382
    %1391 = vst.msk [vmem:[#allocation8 + $0x18] sm:$0xff] %vm1123, %v1383
    %1392 = vst [vmem:[#allocation8 + $0x20] sm:$0xff] %v1384
    %1393 = vst.msk [vmem:[#allocation8 + $0x28] sm:$0xff] %vm1123, %v1385
    %1394 = vst [vmem:[#allocation8 + $0x30] sm:$0xff] %v1386
    %1395 = vst.msk [vmem:[#allocation8 + $0x38] sm:$0xff] %vm1123, %v1387
    // Predicated region
    $region30: #{tpu_custom_call.1} parent=1 // pred_check
      _
    $region31: #{tpu_custom_call.1} parent=1 // pred_check_branch
      %1397 = sbr.rel (0) target = $region33
    $region32: #{tpu_custom_call.1} parent=1 // pred_region
      %s1399 = ssub.s32 1024, 1024
      %1400 = vsyncadd [#allocation5], %s1399
      %s1401 = sshll.u32 [#allocation8], 4
      %s1402 = int_to_ptr.vmem [resolvable:$true] %s1401
      %1407 = dma.vmem_to_hbm [thread:$0]  %s1402, 1024, %s5, [#allocation5], 256, 256, 16
    $region33: #{tpu_custom_call.1} parent=1 // pred_fallthru
      _
    // Predicated region
    $region34: #{tpu_custom_call.1} parent=1 // pred_check
      _
    $region35: #{tpu_custom_call.1} parent=1 // pred_check_branch
      %1409 = sbr.rel (0) target = $region37
    $region36: #{tpu_custom_call.1} parent=1 // pred_region
      %1410 = dma.done [#allocation5], 1024
    $region37: #{tpu_custom_call.1} parent=1 // pred_fallthru
      _
    %1411 = vsyncpa [#allocation4], 1
    %1412 = vsyncpa [#allocation7], 1
    %1413 = vsyncpa [#allocation5], 1

</llo_original>
